<compile_context>
chip_gen: v7x
topology: tpu7x:2x2x1
jax: 0.10.0
libtpu: 0.0.40
codegen_flags: <defaults>
</compile_context>

<pallas_src>
import functools

import jax
import jax.numpy as jnp
from jax.experimental import pallas as pl
from jax.experimental.pallas import tpu as pltpu


def _round_up(x, m):
    return ((x + m - 1) // m) * m


def _coding_loss_kernel(labels_ref, x_ref, code_ref, bias_ref, out_ref, *,
                        label_smoothing, n_rows):
    # x_ref:     [TN, C]   activations (bf16 or f32), one batch tile
    # code_ref:  [K,  C]   2*code_book - 1  (values +/-1), resident
    # bias_ref:  [1,  K]   D - sum_d code[k,d], f32, resident
    # labels_ref:[TN, 1]   int32 class ids for this tile
    # out_ref:   [1,  1]   f32 partial (un-normalized) loss for this tile (SMEM)
    x = x_ref[...]                      # keep native dtype for the MXU operand
    code = code_ref[...]
    bias = bias_ref[...].astype(jnp.float32)

    tn = x.shape[0]
    k = code.shape[0]

    # Hamming similarity via MXU (contract last dims; no transpose, f32 acc).
    xc = jax.lax.dot_general(
        x, code,
        dimension_numbers=(((1,), (1,)), ((), ())),
        preferred_element_type=jnp.float32)          # [TN, K] f32
    sim = xc + bias                                  # [TN, K]

    # log-softmax pieces (row-wise over the class axis), all f32.
    m = jnp.max(sim, axis=1, keepdims=True)                              # [TN,1]
    lse = jnp.log(jnp.sum(jnp.exp(sim - m), axis=1, keepdims=True))      # [TN,1]

    # gather sim[i, y_i] with an iota compare (scatter_ equivalent).
    labels = labels_ref[...]                                             # [TN,1]
    cls = jax.lax.broadcasted_iota(jnp.int32, (tn, k), 1)
    one_hot = (cls == labels).astype(jnp.float32)
    sim_y = jnp.sum(one_hot * sim, axis=1, keepdims=True)                # [TN,1]
    row_sum = jnp.sum(sim, axis=1, keepdims=True)                        # [TN,1]

    ls = jnp.float32(label_smoothing)
    # loss_i = (m_i + lse_i) - [ (1-ls)*sim[i,y_i] + (ls/K)*sum_k sim[i,k] ]
    per_row = (m + lse) - ((1.0 - ls) * sim_y + (ls / jnp.float32(k)) * row_sum)

    # Mask rows past the true batch size (last, partial tile). Use a select so
    # garbage (possibly NaN) padded rows cannot contaminate the sum.
    row0 = pl.program_id(0) * tn
    rid = row0 + jax.lax.broadcasted_iota(jnp.int32, (tn, 1), 0)
    per_row = jnp.where(rid < n_rows, per_row, jnp.float32(0.0))

    out_ref[0, 0] = jnp.sum(per_row)


def coding_loss(inputs, labels, code_book, label_smoothing=0.1, tile_rows=1024):
    """inputs: [N, C] (f32 or bf16), labels: [N] int, code_book: [C, C] -> scalar f32.

    Pass `inputs` in bf16 to halve the HBM input stream; the MXU still
    accumulates in f32 and the softmax/loss math is done in f32.
    """
    n, c = inputs.shape
    k, d = code_book.shape
    assert d == c and k == c, "square code book expected (n_classes == code length)"

    # Batch tile: biggest that makes sense, multiple of 8 sublanes.
    tn = min(_round_up(int(tile_rows), 8), _round_up(n, 8))
    num_tiles = pl.cdiv(n, tn)

    # Precompute loop-invariant code-book terms in the wrapper (hoisted out of
    # the per-tile hot path): +/-1 code matrix for the MXU and the [1,K] bias.
    code_f32 = code_book.astype(jnp.float32)
    code_pm1 = (2.0 * code_f32 - 1.0).astype(inputs.dtype)            # [K, C], exact in bf16
    bias = (jnp.float32(d) - jnp.sum(code_f32, axis=1))[None, :]      # [1, K] f32
    labels2d = labels.astype(jnp.int32).reshape(n, 1)

    kernel = functools.partial(
        _coding_loss_kernel,
        label_smoothing=float(label_smoothing),
        n_rows=int(n))

    in_itemsize = jnp.dtype(inputs.dtype).itemsize
    cost = pl.CostEstimate(
        flops=int(2 * n * c * k + 8 * n * k),
        transcendentals=int(n * k + n),
        bytes_accessed=int(n * c * in_itemsize + n * 4
                           + k * c * in_itemsize + k * 4 + num_tiles * 4),
    )

    partials = pl.pallas_call(
        kernel,
        out_shape=jax.ShapeDtypeStruct((num_tiles, 1), jnp.float32),
        grid_spec=pltpu.PrefetchScalarGridSpec(
            num_scalar_prefetch=0,
            grid=(num_tiles,),
            in_specs=[
                pl.BlockSpec((tn, 1), lambda i: (i, 0)),   # labels  [TN, 1]
                pl.BlockSpec((tn, c), lambda i: (i, 0)),   # inputs  [TN, C]
                pl.BlockSpec((k, c), lambda i: (0, 0)),    # code    [K, C] (resident)
                pl.BlockSpec((1, k), lambda i: (0, 0)),    # bias    [1, K] (resident)
            ],
            out_specs=pl.BlockSpec((1, 1), lambda i: (i, 0),
                                   memory_space=pltpu.MemorySpace.SMEM),
        ),
        compiler_params=pltpu.CompilerParams(
            dimension_semantics=("parallel",)),
        cost_estimate=cost,
    )(labels2d, inputs, code_pm1, bias)

    # Final reduce + mean over the true batch size in the wrapper.
    return jnp.sum(partials) / jnp.float32(n)


if __name__ == "__main__":
    key = jax.random.PRNGKey(0)
    k_x, k_lbl, k_code = jax.random.split(key, 3)

    N, C = 8, 16  # batch, n_classes (== code length)
    # "inputs" are soft code activations in [0, 1]
    inputs = jax.random.uniform(k_x, (N, C), dtype=jnp.float32)
    labels = jax.random.randint(k_lbl, (N,), 0, C, dtype=jnp.int32)
    # binary code book, one code row per class
    code_book = jax.random.bernoulli(k_code, 0.5, (C, C)).astype(jnp.float32)

    # Stream activations in bf16 (recommended): halves HBM traffic, f32 accumulation.
    loss = coding_loss(inputs.astype(jnp.bfloat16), labels, code_book,
                       label_smoothing=0.1)
    jax.block_until_ready(loss)
    print("KERNEL_OK")
</pallas_src>

<mosaic_0001>
module attributes {stable_mosaic.version = 11 : i64} {
  func.func @_coding_loss_kernel(%arg0: i32, %arg1: memref<8x1xi32, #tpu.memory_space<vmem>>, %arg2: memref<8x16xbf16, #tpu.memory_space<vmem>>, %arg3: memref<16x16xbf16, #tpu.memory_space<vmem>>, %arg4: memref<1x16xf32, #tpu.memory_space<vmem>>, %arg5: memref<1x1xf32, #tpu.memory_space<smem>>) attributes {dimension_semantics = [#tpu.dimension_semantics<parallel>], iteration_bounds = array<i64: 1>, scalar_prefetch = 0 : i64, scratch_operands = 0 : i64, tpu.core_type = #tpu.core_type<tc>, window_params = [{transform_indices = @transform_0, window_bounds = array<i64: 8, 1>}, {transform_indices = @transform_1, window_bounds = array<i64: 8, 16>}, {pipeline_mode = #tpu.pipeline_mode<synchronous>, transform_indices = @transform_2, window_bounds = array<i64: 16, 16>}, {pipeline_mode = #tpu.pipeline_mode<synchronous>, transform_indices = @transform_3, window_bounds = array<i64: 1, 16>}, {transform_indices = @transform_4, window_bounds = array<i64: 1, 1>}]} {
    %c0 = arith.constant 0 : index
    %c0_0 = arith.constant 0 : index
    %0 = vector.load %arg2[%c0, %c0_0] : memref<8x16xbf16, #tpu.memory_space<vmem>>, vector<8x16xbf16>
    %c0_1 = arith.constant 0 : index
    %c0_2 = arith.constant 0 : index
    %1 = vector.load %arg3[%c0_1, %c0_2] : memref<16x16xbf16, #tpu.memory_space<vmem>>, vector<16x16xbf16>
    %c0_3 = arith.constant 0 : index
    %c0_4 = arith.constant 0 : index
    %2 = vector.load %arg4[%c0_3, %c0_4] : memref<1x16xf32, #tpu.memory_space<vmem>>, vector<1x16xf32>
    %cst = arith.constant dense<0.000000e+00> : vector<8x16xf32>
    %3 = tpu.matmul %0, %1, %cst {dimension_numbers = #tpu.dot_dimension_numbers<[1], [1], [0], [0], [0, 0, 1, 0], [], []>} : vector<8x16xbf16>, vector<16x16xbf16>, vector<8x16xf32> -> vector<8x16xf32>
    %4 = vector.broadcast %2 : vector<1x16xf32> to vector<8x16xf32>
    %5 = arith.addf %3, %4 : vector<8x16xf32>
    %cst_5 = arith.constant dense<0xFF800000> : vector<8xf32>
    %6 = vector.multi_reduction <maximumf>, %5, %cst_5 [1] : vector<8x16xf32> to vector<8xf32>
    %7 = vector.shape_cast %6 : vector<8xf32> to vector<8x1xf32>
    %8 = vector.broadcast %7 : vector<8x1xf32> to vector<8x16xf32>
    %9 = arith.subf %5, %8 : vector<8x16xf32>
    %10 = math.exp %9 : vector<8x16xf32>
    %cst_6 = arith.constant dense<0.000000e+00> : vector<8xf32>
    %11 = vector.multi_reduction <add>, %10, %cst_6 [1] : vector<8x16xf32> to vector<8xf32>
    %12 = vector.shape_cast %11 : vector<8xf32> to vector<8x1xf32>
    %13 = math.log %12 : vector<8x1xf32>
    %c0_7 = arith.constant 0 : index
    %c0_8 = arith.constant 0 : index
    %14 = vector.load %arg1[%c0_7, %c0_8] : memref<8x1xi32, #tpu.memory_space<vmem>>, vector<8x1xi32>
    %15 = tpu.iota {dimensions = array<i32: 1>} : vector<8x16xi32>
    %16 = vector.broadcast %14 : vector<8x1xi32> to vector<8x16xi32>
    %17 = arith.cmpi eq, %15, %16 : vector<8x16xi32>
    %18 = arith.extui %17 : vector<8x16xi1> to vector<8x16xi32>
    %19 = arith.sitofp %18 : vector<8x16xi32> to vector<8x16xf32>
    %20 = arith.mulf %19, %5 : vector<8x16xf32>
    %cst_9 = arith.constant dense<0.000000e+00> : vector<8xf32>
    %21 = vector.multi_reduction <add>, %20, %cst_9 [1] : vector<8x16xf32> to vector<8xf32>
    %22 = vector.shape_cast %21 : vector<8xf32> to vector<8x1xf32>
    %cst_10 = arith.constant dense<0.000000e+00> : vector<8xf32>
    %23 = vector.multi_reduction <add>, %5, %cst_10 [1] : vector<8x16xf32> to vector<8xf32>
    %24 = vector.shape_cast %23 : vector<8xf32> to vector<8x1xf32>
    %25 = arith.addf %7, %13 : vector<8x1xf32>
    %cst_11 = arith.constant 1.000000e+00 : f32
    %cst_12 = arith.constant 1.000000e-01 : f32
    %26 = arith.subf %cst_11, %cst_12 : f32
    %27 = vector.broadcast %26 : f32 to vector<8x1xf32>
    %28 = arith.mulf %27, %22 : vector<8x1xf32>
    %cst_13 = arith.constant 1.000000e-01 : f32
    %cst_14 = arith.constant 1.600000e+01 : f32
    %29 = arith.divf %cst_13, %cst_14 : f32
    %30 = vector.broadcast %29 : f32 to vector<8x1xf32>
    %31 = arith.mulf %30, %24 : vector<8x1xf32>
    %32 = arith.addf %28, %31 : vector<8x1xf32>
    %33 = arith.subf %25, %32 : vector<8x1xf32>
    %c8_i32 = arith.constant 8 : i32
    %34 = arith.muli %arg0, %c8_i32 : i32
    %35 = tpu.iota {dimensions = array<i32: 0>} : vector<8x1xi32>
    %36 = vector.broadcast %34 : i32 to vector<8x1xi32>
    %37 = arith.addi %36, %35 : vector<8x1xi32>
    %c8_i32_15 = arith.constant 8 : i32
    %38 = vector.broadcast %c8_i32_15 : i32 to vector<8x1xi32>
    %39 = arith.cmpi slt, %37, %38 : vector<8x1xi32>
    %cst_16 = arith.constant 0.000000e+00 : f32
    %40 = vector.broadcast %cst_16 : f32 to vector<8x1xf32>
    %41 = arith.select %39, %33, %40 : vector<8x1xi1>, vector<8x1xf32>
    %42 = vector.shape_cast %41 : vector<8x1xf32> to vector<1x8x1xf32>
    %cst_17 = arith.constant dense<0.000000e+00> : vector<1xf32>
    %43 = vector.multi_reduction <add>, %42, %cst_17 [1, 2] : vector<1x8x1xf32> to vector<1xf32>
    %44 = vector.shape_cast %43 : vector<1xf32> to vector<1x1x1xf32>
    %45 = vector.extract %44[0, 0, 0] : f32 from vector<1x1x1xf32>
    %c0_18 = arith.constant 0 : index
    %c0_19 = arith.constant 0 : index
    %46 = memref.load %arg5[%c0_18, %c0_19] : memref<1x1xf32, #tpu.memory_space<smem>>
    memref.store %45, %arg5[%c0_18, %c0_19] : memref<1x1xf32, #tpu.memory_space<smem>>
    return
  }
  func.func @transform_0(%arg0: i32) -> (i32, i32) {
    %c0_i32 = arith.constant 0 : i32
    %c0_i32_0 = arith.constant 0 : i32
    return %arg0, %c0_i32 : i32, i32
  }
  func.func @transform_1(%arg0: i32) -> (i32, i32) {
    %c0_i32 = arith.constant 0 : i32
    %c0_i32_0 = arith.constant 0 : i32
    return %arg0, %c0_i32 : i32, i32
  }
  func.func @transform_2(%arg0: i32) -> (i32, i32) {
    %c0_i32 = arith.constant 0 : i32
    %c0_i32_0 = arith.constant 0 : i32
    %c0_i32_1 = arith.constant 0 : i32
    return %c0_i32, %c0_i32_0 : i32, i32
  }
  func.func @transform_3(%arg0: i32) -> (i32, i32) {
    %c0_i32 = arith.constant 0 : i32
    %c0_i32_0 = arith.constant 0 : i32
    %c0_i32_1 = arith.constant 0 : i32
    return %c0_i32, %c0_i32_0 : i32, i32
  }
  func.func @transform_4(%arg0: i32) -> (i32, i32) {
    %c0_i32 = arith.constant 0 : i32
    %c0_i32_0 = arith.constant 0 : i32
    return %arg0, %c0_i32 : i32, i32
  }
}

</mosaic_0001>

<llo_original>
// kernel: tpu_custom_call.1
$region0: #{tpu_custom_call.1}
  #allocation0 [shape = 'u32[]', space=smem, size = 0x4, offset = 0x4, fixed_abs, tag = 'smem constant byte address 0x4 - core index']
  #allocation1 [shape = 'u32[144,128]{1,0:T(1,128)}', space=vmem, size = 0x12000, scoped, tag = 'internal scratch']
  %s0 = inlined_call_operand.vmem [shape: s32[8,1], index: 0, kind: input, shape index: {}]
  %s1 = inlined_call_operand.vmem [shape: bf16[8,16], index: 1, kind: input, shape index: {}]
  %s2 = inlined_call_operand.vmem [shape: bf16[16,16], index: 2, kind: input, shape index: {}]
  %s3 = inlined_call_operand.vmem [shape: f32[1,16], index: 3, kind: input, shape index: {}]
  %s4 = inlined_call_operand.hbm [shape: f32[1,1], index: 4, kind: output, shape index: {}]
  %s5 = sld [smem:[#allocation0]]
  $region26: #{tpu_custom_call.1} parent=0
    _
  %s7 = ssub.s32 1, %s5
  %s8 = scalar_select 0, %s7, %s5
  $region1: #{tpu_custom_call.1} parent=0
    #allocation2 [shape = 'u8[512]{0}', space=smem, size = 0x200, scoped, tag = 'output window, operand 0, single buffered']
    #allocation3 [shape = 's32[1]{0}', space=sflag, size = 0x4, scoped, tag = 'scoped memory for tpu_custom_call.1']
    %9 = vsyncpa [#allocation3], 0
    // Predicated region
    $region2: #{tpu_custom_call.1} parent=1 // pred_check
      _
    $region3: #{tpu_custom_call.1} parent=1 // pred_check_branch
      %11 = sbr.rel (0) target = $region5
    $region4: #{tpu_custom_call.1} parent=1 // pred_region
      _
    $region5: #{tpu_custom_call.1} parent=1 // pred_fallthru
      _
    // Predicated region
    $region6: #{tpu_custom_call.1} parent=1 // pred_check
      _
    $region7: #{tpu_custom_call.1} parent=1 // pred_check_branch
      %13 = sbr.rel (0) target = $region9
    $region8: #{tpu_custom_call.1} parent=1 // pred_region
      _
    $region9: #{tpu_custom_call.1} parent=1 // pred_fallthru
      _
    // Predicated region
    $region10: #{tpu_custom_call.1} parent=1 // pred_check
      _
    $region11: #{tpu_custom_call.1} parent=1 // pred_check_branch
      %15 = sbr.rel (0) target = $region13
    $region12: #{tpu_custom_call.1} parent=1 // pred_region
      _
    $region13: #{tpu_custom_call.1} parent=1 // pred_fallthru
      _
    // Predicated region
    $region14: #{tpu_custom_call.1} parent=1 // pred_check
      _
    $region15: #{tpu_custom_call.1} parent=1 // pred_check_branch
      %17 = sbr.rel (0) target = $region17
    $region16: #{tpu_custom_call.1} parent=1 // pred_region
      _
    $region17: #{tpu_custom_call.1} parent=1 // pred_fallthru
      _
    %v19 = vld [vmem:[%s1] sm:$0xf]
    %v20 = vld [vmem:[%s2] sm:$0xf]
    %v21 = vld [vmem:[%s2 + $0x4] sm:$0xf]
    %v22 = vld [vmem:[%s3] sm:$0x1]
    %v24 = vlaneseq
    %v25 = vshrl.u32 %v24, 7
    %v26 = vsub.s32 0, %v25
    %v27 = vrot.slane %v22, %v26
    %v31 = vunpack.c.l.b16 %v20
    %v32 = vunpack.c.l.b16 %v21
    %v33 = vpack.c.b16 %v32, %v31
    %vm34 = vcmask 130048
    %v36 = vsel %vm34, %v19, 0
    %v39 = vsel %vm34, %v33, 0
    %41 = vmatprep.subr.bf16.mxu0 0
    %42 = vmatpush1.bf16.xpose.msra.mxu0 %v39
    %43 = vmatprep.subr.bf16.mxu0 0
    %44 = vmatpush1.bf16.xpose.msra.mxu0 0
    %45 = vmatprep.subr.bf16.mxu0 0
    %46 = vmatpush1.bf16.xpose.msra.mxu0 0
    %47 = vmatprep.subr.bf16.mxu0 0
    %48 = vmatpush1.bf16.xpose.msra.mxu0 0
    %49 = vmatprep.subr.bf16.mxu0 0
    %50 = vmatpush1.bf16.xpose.msra.mxu0 0
    %51 = vmatprep.subr.bf16.mxu0 0
    %52 = vmatpush1.bf16.xpose.msra.mxu0 0
    %53 = vmatprep.subr.bf16.mxu0 0
    %54 = vmatpush1.bf16.xpose.msra.mxu0 0
    %55 = vmatprep.subr.bf16.mxu0 0
    %56 = vmatpush1.bf16.xpose.msra.mxu0 0
    %57 = vmatprep.subr.bf16.mxu0 0
    %58 = vmatpush1.bf16.xpose.msra.mxu0 0
    %59 = vmatprep.subr.bf16.mxu0 0
    %60 = vmatpush1.bf16.xpose.msra.mxu0 0
    %61 = vmatprep.subr.bf16.mxu0 0
    %62 = vmatpush1.bf16.xpose.msra.mxu0 0
    %63 = vmatprep.subr.bf16.mxu0 0
    %64 = vmatpush1.bf16.xpose.msra.mxu0 0
    %65 = vmatprep.subr.bf16.mxu0 0
    %66 = vmatpush1.bf16.xpose.msra.mxu0 0
    %67 = vmatprep.subr.bf16.mxu0 0
    %68 = vmatpush1.bf16.xpose.msra.mxu0 0
    %69 = vmatprep.subr.bf16.mxu0 0
    %70 = vmatpush1.bf16.xpose.msra.mxu0 0
    %71 = vmatprep.subr.bf16.mxu0 0
    %72 = vmatpush1.bf16.xpose.msra.mxu0 0
    %73 = vmatprep.mubr.bf16.mxu0 0
    %74 = vmatmul.mubr.bf16.gmra.mrb[0].mxu0 %v36
    %v75 = vpop.f32.mrb[0].mxu0
    %v76 = vadd.f32 %v27, %v75
    %v77 = vpop.f32.mrb[0].mxu0
    %v78 = vpop.f32.mrb[0].mxu0
    %v79 = vpop.f32.mrb[0].mxu0
    %80 = vdwg.mxu0
    %v81 = vsel %vm34, %v76, -inf
    %82 = vmax.xlane.f32.xlu0 %v81
    %v83 = vpop.xlane.xlu0 %82
    %v84 = vsub.f32 %v76, %v83
    %v85 = vmul.f32 %v84, 1.442695
    %v86 = vpow.pop %v85
    %v87 = vsel %vm34, %v86, 0.0
    %88 = vadd.xlane.f32.xlu0 %v87
    %v89 = vpop.xlane.xlu0 %88
    %v90 = vlog2.pop %v89
    %v91 = vmul.f32 %v90, 0.6931472
    %v92 = vld [vmem:[%s0] sm:$0xff]
    %v93 = vlaneseq
    %v94 = vand.u32 %v93, 127
    %95 = vset.pattern.permute.xlu0 0
    %96 = vperm.xlu0 %95, %v92
    %v97 = vpop.permute.xlu0 %96
    %vm98 = vcmp.eq.s32.totalorder %v94, %v97
    %v99 = vsel %vm98, 1, 0
    %v100 = vcvt.s32.f32 %v99
    %v101 = vmul.f32 %v100, %v76
    %v102 = vsel %vm34, %v101, 0.0
    %103 = vadd.xlane.f32.xlu0 %v102
    %v104 = vpop.xlane.xlu0 %103
    %v105 = vsel %vm34, %v76, 0.0
    %106 = vadd.xlane.f32.xlu0 %v105
    %v107 = vpop.xlane.xlu0 %106
    %v108 = vadd.f32 %v83, %v91
    %v109 = vmul.f32 %v104, 0.9
    %v110 = vmul.f32 %v107, 0.00625
    %v111 = vadd.f32 %v109, %v110
    %v112 = vsub.f32 %v108, %v111
    %s113 = smul.u32 0, 8
    %v114 = vlaneseq
    %v115 = vshrl.u32 %v114, 7
    %v116 = vstv %s113
    %v117 = vadd.s32 %v116, %v115
    %vm118 = vcmp.lt.s32.totalorder %v117, 8
    %v119 = vsel %vm118, %v112, 0.0
    %vm120 = vcmask 7168
    %v121 = vsel %vm120, %v119, 0.0
    %122 = vadd.xlane.f32.xlu0 %v121
    %v123 = vpop.xlane.xlu0 %122
    %v124 = vrot.slane %v123, 4
    %v125 = vadd.f32 %v123, %v124
    %v126 = vrot.slane %v125, 2
    %v127 = vadd.f32 %v125, %v126
    %v128 = vrot.slane %v127, 1
    %v129 = vadd.f32 %v127, %v128
    %s130 = vtos %v129
    %s131 = scalar_lea.smem [#allocation2], 0
    %132 = sst [smem:[%s131]] %s130
    // Predicated region
    $region18: #{tpu_custom_call.1} parent=1 // pred_check
      _
    $region19: #{tpu_custom_call.1} parent=1 // pred_check_branch
      %134 = sbr.rel (0) target = $region21
    $region20: #{tpu_custom_call.1} parent=1 // pred_region
      %s136 = ssub.s32 16, 16
      %137 = vsyncadd [#allocation3], %s136
      %140 = dma.smem_to_hbm [#allocation2], 16, %s4, [#allocation3]
    $region21: #{tpu_custom_call.1} parent=1 // pred_fallthru
      _
    // Predicated region
    $region22: #{tpu_custom_call.1} parent=1 // pred_check
      _
    $region23: #{tpu_custom_call.1} parent=1 // pred_check_branch
      %142 = sbr.rel (0) target = $region25
    $region24: #{tpu_custom_call.1} parent=1 // pred_region
      %143 = dma.done [#allocation3], 16
    $region25: #{tpu_custom_call.1} parent=1 // pred_fallthru
      _
    %144 = sfence
    %145 = vsyncpa [#allocation3], 1

</llo_original>
